<compile_context>
chip_gen: v5e
topology: v5e:2x2
jax: 0.10.0
libtpu: 0.0.40
codegen_flags: <defaults>
</compile_context>

<pallas_src>
import math
from functools import partial

import jax
import jax.numpy as jnp
import numpy as np
from jax.experimental import pallas as pl
from jax.experimental.pallas import tpu as pltpu


_VMEM_LIMIT = 48 * 1024 * 1024   # explicit cap that also fits v7x's 64 MiB VMEM


def _pick_tile(dim, preferred, granule):
    """Largest multiple of `granule` that divides `dim` and is <= `preferred`;
    falls back to the full dim (a full-extent block is always legal)."""
    if dim <= preferred:
        return dim
    t = (preferred // granule) * granule
    while t >= granule:
        if dim % t == 0:
            return t
        t -= granule
    return dim


# ---------------------------------------------------------------------------
# Tiled linear layer: y = x @ w + b
# ---------------------------------------------------------------------------
def _linear_kernel(x_ref, w_ref, b_ref, o_ref, acc_ref):
    k = pl.program_id(2)

    @pl.when(k == 0)
    def _():
        acc_ref[...] = jnp.zeros(acc_ref.shape, jnp.float32)

    acc_ref[...] += jnp.dot(x_ref[...], w_ref[...],
                            preferred_element_type=jnp.float32)

    @pl.when(k == pl.num_programs(2) - 1)
    def _():
        o_ref[...] = (acc_ref[...] +
                      b_ref[...].astype(jnp.float32)).astype(o_ref.dtype)


def _linear(x, w, b, out_dtype, tm_pref=256, tn_pref=256, tk_pref=512):
    M, K = x.shape
    _, N = w.shape
    tm = _pick_tile(M, tm_pref, 8)
    tn = _pick_tile(N, tn_pref, 128)
    tk = _pick_tile(K, tk_pref, 128)
    grid = (M // tm, N // tn, K // tk)
    return pl.pallas_call(
        _linear_kernel,
        out_shape=jax.ShapeDtypeStruct((M, N), out_dtype),
        grid=grid,
        in_specs=[
            pl.BlockSpec((tm, tk), lambda i, j, k: (i, k)),   # x tile
            pl.BlockSpec((tk, tn), lambda i, j, k: (k, j)),   # w tile
            pl.BlockSpec((1, tn), lambda i, j, k: (0, j)),    # bias tile
        ],
        out_specs=pl.BlockSpec((tm, tn), lambda i, j, k: (i, j)),
        scratch_shapes=[pltpu.VMEM((tm, tn), jnp.float32)],
        compiler_params=pltpu.CompilerParams(
            dimension_semantics=("parallel", "parallel", "arbitrary"),
            vmem_limit_bytes=_VMEM_LIMIT),
    )(x, w, b)


# ---------------------------------------------------------------------------
# Flash attention (online softmax) over (batch*head, q_tile, kv_tile)
# ---------------------------------------------------------------------------
def _flash_attn_kernel(q_ref, k_ref, v_ref, mask_ref, o_ref,
                       m_ref, l_ref, acc_ref, *, scale):
    ki = pl.program_id(2)

    @pl.when(ki == 0)
    def _():
        m_ref[...] = jnp.full(m_ref.shape, -jnp.inf, jnp.float32)
        l_ref[...] = jnp.zeros(l_ref.shape, jnp.float32)
        acc_ref[...] = jnp.zeros(acc_ref.shape, jnp.float32)

    q = q_ref[...]                                   # (tq, hd) bf16
    k = k_ref[...]                                   # (tkv, hd) bf16
    v = v_ref[...]                                   # (tkv, hd) bf16
    mask = mask_ref[...].astype(jnp.float32)         # (tq, tkv)

    # Contract the last dims of q and k directly (MXU-native, no k transpose).
    # Scaling after the dot == reference's `q / sqrt(hd)` before the dot.
    s = jax.lax.dot_general(q, k, (((1,), (1,)), ((), ())),
                            preferred_element_type=jnp.float32) * scale
    # Exact reference mask semantics (also correct for non-binary soft masks).
    s = s * mask - 10000.0 * (1.0 - mask)

    m_prev = m_ref[...]
    m_new = jnp.maximum(m_prev, jnp.max(s, axis=-1, keepdims=True))
    alpha = jnp.exp(m_prev - m_new)
    p = jnp.exp(s - m_new)
    l_ref[...] = alpha * l_ref[...] + jnp.sum(p, axis=-1, keepdims=True)
    acc_ref[...] = alpha * acc_ref[...] + jnp.dot(
        p.astype(v.dtype), v, preferred_element_type=jnp.float32)
    m_ref[...] = m_new

    @pl.when(ki == pl.num_programs(2) - 1)
    def _():
        o_ref[...] = (acc_ref[...] *
                      pl.reciprocal(l_ref[...], approx=True)).astype(o_ref.dtype)


def _flash_attention(q, k, v, mask, num_heads, scale,
                     tq_pref=256, tkv_pref=256):
    BH, S, hd = q.shape
    tq = _pick_tile(S, tq_pref, 8)       # sublane granularity for q / out tiles
    tkv = _pick_tile(S, tkv_pref, 128)   # lane granularity for the mask tile
    grid = (BH, S // tq, S // tkv)
    kernel = partial(_flash_attn_kernel, scale=scale)
    return pl.pallas_call(
        kernel,
        out_shape=jax.ShapeDtypeStruct((BH, S, hd), q.dtype),
        grid=grid,
        in_specs=[
            pl.BlockSpec((None, tq, hd), lambda h, qi, ki: (h, qi, 0)),
            pl.BlockSpec((None, tkv, hd), lambda h, qi, ki: (h, ki, 0)),
            pl.BlockSpec((None, tkv, hd), lambda h, qi, ki: (h, ki, 0)),
            pl.BlockSpec((None, tq, tkv),
                         lambda h, qi, ki: (h // num_heads, qi, ki)),
        ],
        out_specs=pl.BlockSpec((None, tq, hd), lambda h, qi, ki: (h, qi, 0)),
        scratch_shapes=[
            pltpu.VMEM((tq, 1), jnp.float32),     # running row max m
            pltpu.VMEM((tq, 1), jnp.float32),     # running denominator l
            pltpu.VMEM((tq, hd), jnp.float32),    # output accumulator
        ],
        compiler_params=pltpu.CompilerParams(
            dimension_semantics=("parallel", "parallel", "arbitrary"),
            vmem_limit_bytes=_VMEM_LIMIT),
    )(q, k, v, mask)


# ---------------------------------------------------------------------------
# Full SelfAttention.forward
# ---------------------------------------------------------------------------
def self_attention_forward(hidden_states, mask, w_qkv, b_qkv, w_o, b_o,
                           num_heads):
    """hidden_states: (B, S, H); mask: (B, 1, S, S) floats (1 keep / 0 mask).
    w_qkv: (H, 3H) pre-transposed so kernels compute x @ w; b_qkv: (1, 3H).
    w_o:   (H, H);                                          b_o:   (1, H).
    Returns (B, S, H) in hidden_states.dtype."""
    B, S, H = hidden_states.shape
    hd = H // num_heads
    cdt = jnp.bfloat16   # MXU-native operand dtype; accumulation stays f32

    x2d = hidden_states.reshape(B * S, H).astype(cdt)
    wqkv = w_qkv.astype(cdt)
    wo = w_o.astype(cdt)
    bqkv = b_qkv.reshape(1, 3 * H).astype(jnp.float32)
    bo = b_o.reshape(1, H).astype(jnp.float32)

    # 1) Fused QKV projection (tiled matmul + bias).
    mixed = _linear(x2d, wqkv, bqkv, out_dtype=cdt)            # (B*S, 3H)

    # 2) Head split = wrapper-side layout plumbing (no in-kernel lane slicing).
    #    The 3H dim is laid out (qkv, head, head_dim), matching the torch split.
    mixed = mixed.reshape(B, S, 3, num_heads, hd).transpose(2, 0, 3, 1, 4)
    q = mixed[0].reshape(B * num_heads, S, hd)
    k = mixed[1].reshape(B * num_heads, S, hd)
    v = mixed[2].reshape(B * num_heads, S, hd)

    mask3 = mask.astype(jnp.float32).reshape(B, S, S)

    # 3) Flash attention (online softmax, never materializes (S,S) per head).
    ctx = _flash_attention(q, k, v, mask3, num_heads,
                           scale=1.0 / math.sqrt(hd))          # (B*NH, S, hd)

    # 4) Merge heads and apply the output dense layer.
    ctx2d = (ctx.reshape(B, num_heads, S, hd)
                .transpose(0, 2, 1, 3)
                .reshape(B * S, H)).astype(cdt)
    out = _linear(ctx2d, wo, bo, out_dtype=hidden_states.dtype)  # (B*S, H)
    return out.reshape(B, S, H)


# ---------------------------------------------------------------------------
# Pure-JAX f32 replica of the PyTorch forward (correctness reference)
# ---------------------------------------------------------------------------
def _reference_forward(x, mask, w_qkv, b_qkv, w_o, b_o, num_heads):
    B, S, H = x.shape
    hn = H // num_heads
    mixed = jnp.einsum("bsh,hk->bsk", x, w_qkv) + b_qkv[0]
    q, k, v = jnp.split(mixed, 3, axis=-1)

    def t(t3):  # [b, s, np*hn] -> [b, np, s, hn]
        return t3.reshape(B, S, num_heads, hn).transpose(0, 2, 1, 3)

    q, k, v = t(q), t(k), t(v)
    scores = jnp.einsum("bnqd,bnkd->bnqk", q / math.sqrt(hn), k)
    scores = scores * mask - 10000.0 * (1.0 - mask)
    probs = jax.nn.softmax(scores, axis=-1)
    ctx = jnp.einsum("bnqk,bnkd->bnqd", probs, v)
    ctx = ctx.transpose(0, 2, 1, 3).reshape(B, S, H)
    return jnp.einsum("bsh,hk->bsk", ctx, w_o) + b_o[0]


if __name__ == "__main__":
    # Small shapes consistent with the module: batch=2, seq=8, hidden=32, heads=4
    B, S, H, NH = 2, 8, 32, 4

    key = jax.random.PRNGKey(0)
    kx, kw1, kb1, kw2, kb2 = jax.random.split(key, 5)

    x = jax.random.normal(kx, (B, S, H), dtype=jnp.float32)

    # init_method-style parameters (std=0.02), stored pre-transposed (x @ W).
    w_qkv = 0.02 * jax.random.normal(kw1, (H, 3 * H), dtype=jnp.float32)
    b_qkv = 0.02 * jax.random.normal(kb1, (1, 3 * H), dtype=jnp.float32)
    w_o = 0.02 * jax.random.normal(kw2, (H, H), dtype=jnp.float32)
    b_o = 0.02 * jax.random.normal(kb2, (1, H), dtype=jnp.float32)

    # Causal float mask with the torch module's broadcasting shape.
    causal = jnp.tril(jnp.ones((S, S), dtype=jnp.float32))
    mask = jnp.broadcast_to(causal, (B, 1, S, S))

    out = self_attention_forward(x, mask, w_qkv, b_qkv, w_o, b_o, NH)
    out = jax.block_until_ready(out)

    ref = _reference_forward(x, mask, w_qkv, b_qkv, w_o, b_o, NH)
    # bf16 MXU operands / bf16 intermediates (vs pure-f32 reference) bound the
    # error well below these tolerances at this configuration's ~1e-2 scale.
    np.testing.assert_allclose(np.asarray(out), np.asarray(ref),
                               rtol=5e-2, atol=5e-3)

    print("KERNEL_OK")
</pallas_src>

<mosaic_0001>
module attributes {stable_mosaic.version = 11 : i64} {
  func.func @_linear_kernel(%arg0: i32, %arg1: i32, %arg2: i32, %arg3: memref<16x32xbf16, #tpu.memory_space<vmem>>, %arg4: memref<32x96xbf16, #tpu.memory_space<vmem>>, %arg5: memref<1x96xf32, #tpu.memory_space<vmem>>, %arg6: memref<16x96xbf16, #tpu.memory_space<vmem>>, %arg7: memref<16x96xf32, #tpu.memory_space<vmem>>) attributes {dimension_semantics = [#tpu.dimension_semantics<parallel>, #tpu.dimension_semantics<parallel>, #tpu.dimension_semantics<arbitrary>], iteration_bounds = array<i64: 1, 1, 1>, scalar_prefetch = 0 : i64, scratch_operands = 1 : i64, tpu.core_type = #tpu.core_type<tc>, window_params = [{transform_indices = @transform_0, window_bounds = array<i64: 16, 32>}, {transform_indices = @transform_1, window_bounds = array<i64: 32, 96>}, {transform_indices = @transform_2, window_bounds = array<i64: 1, 96>}, {transform_indices = @transform_3, window_bounds = array<i64: 16, 96>}]} {
    %c0_i32 = arith.constant 0 : i32
    %0 = arith.cmpi eq, %arg2, %c0_i32 : i32
    %1 = arith.extui %0 : i1 to i32
    %c0_i32_0 = arith.constant 0 : i32
    %2 = arith.cmpi ne, %1, %c0_i32_0 : i32
    scf.if %2 {
      %cst_10 = arith.constant 0.000000e+00 : f32
      %12 = vector.broadcast %cst_10 : f32 to vector<16x96xf32>
      %c0_11 = arith.constant 0 : index
      %c0_12 = arith.constant 0 : index
      %13 = vector.load %arg7[%c0_11, %c0_12] : memref<16x96xf32, #tpu.memory_space<vmem>>, vector<16x96xf32>
      tpu.vector_store %arg7[%c0_11, %c0_12], %12 {strides = array<i32>} : memref<16x96xf32, #tpu.memory_space<vmem>>, vector<16x96xf32>,
    } else {
    }
    %c0 = arith.constant 0 : index
    %c0_1 = arith.constant 0 : index
    %3 = vector.load %arg7[%c0, %c0_1] : memref<16x96xf32, #tpu.memory_space<vmem>>, vector<16x96xf32>
    %c0_2 = arith.constant 0 : index
    %c0_3 = arith.constant 0 : index
    %4 = vector.load %arg3[%c0_2, %c0_3] : memref<16x32xbf16, #tpu.memory_space<vmem>>, vector<16x32xbf16>
    %c0_4 = arith.constant 0 : index
    %c0_5 = arith.constant 0 : index
    %5 = vector.load %arg4[%c0_4, %c0_5] : memref<32x96xbf16, #tpu.memory_space<vmem>>, vector<32x96xbf16>
    %cst = arith.constant dense<0.000000e+00> : vector<16x96xf32>
    %6 = tpu.matmul %4, %5, %cst {dimension_numbers = #tpu.dot_dimension_numbers<[1], [0], [0], [1], [0, 0, 1, 1], [], []>} : vector<16x32xbf16>, vector<32x96xbf16>, vector<16x96xf32> -> vector<16x96xf32>
    %7 = arith.addf %3, %6 : vector<16x96xf32>
    %c0_6 = arith.constant 0 : index
    %c0_7 = arith.constant 0 : index
    %8 = vector.load %arg7[%c0_6, %c0_7] : memref<16x96xf32, #tpu.memory_space<vmem>>, vector<16x96xf32>
    tpu.vector_store %arg7[%c0_6, %c0_7], %7 {strides = array<i32>} : memref<16x96xf32, #tpu.memory_space<vmem>>, vector<16x96xf32>,
    %c0_i32_8 = arith.constant 0 : i32
    %9 = arith.cmpi eq, %arg2, %c0_i32_8 : i32
    %10 = arith.extui %9 : i1 to i32
    %c0_i32_9 = arith.constant 0 : i32
    %11 = arith.cmpi ne, %10, %c0_i32_9 : i32
    scf.if %11 {
      %c0_10 = arith.constant 0 : index
      %c0_11 = arith.constant 0 : index
      %12 = vector.load %arg7[%c0_10, %c0_11] : memref<16x96xf32, #tpu.memory_space<vmem>>, vector<16x96xf32>
      %c0_12 = arith.constant 0 : index
      %c0_13 = arith.constant 0 : index
      %13 = vector.load %arg5[%c0_12, %c0_13] : memref<1x96xf32, #tpu.memory_space<vmem>>, vector<1x96xf32>
      %14 = vector.broadcast %13 : vector<1x96xf32> to vector<16x96xf32>
      %15 = arith.addf %12, %14 : vector<16x96xf32>
      %16 = arith.truncf %15 : vector<16x96xf32> to vector<16x96xbf16>
      %c0_14 = arith.constant 0 : index
      %c0_15 = arith.constant 0 : index
      %17 = vector.load %arg6[%c0_14, %c0_15] : memref<16x96xbf16, #tpu.memory_space<vmem>>, vector<16x96xbf16>
      tpu.vector_store %arg6[%c0_14, %c0_15], %16 {strides = array<i32>} : memref<16x96xbf16, #tpu.memory_space<vmem>>, vector<16x96xbf16>,
    } else {
    }
    return
  }
  func.func @transform_0(%arg0: i32, %arg1: i32, %arg2: i32) -> (i32, i32) {
    %c0_i32 = arith.constant 0 : i32
    return %arg0, %arg2 : i32, i32
  }
  func.func @transform_1(%arg0: i32, %arg1: i32, %arg2: i32) -> (i32, i32) {
    %c0_i32 = arith.constant 0 : i32
    return %arg2, %arg1 : i32, i32
  }
  func.func @transform_2(%arg0: i32, %arg1: i32, %arg2: i32) -> (i32, i32) {
    %c0_i32 = arith.constant 0 : i32
    %c0_i32_0 = arith.constant 0 : i32
    return %c0_i32, %arg1 : i32, i32
  }
  func.func @transform_3(%arg0: i32, %arg1: i32, %arg2: i32) -> (i32, i32) {
    %c0_i32 = arith.constant 0 : i32
    return %arg0, %arg1 : i32, i32
  }
}

</mosaic_0001>

<llo_original>
// kernel: tpu_custom_call.1
$region0: #{tpu_custom_call.1}
  #allocation0 [shape = 'u32[]', space=smem, size = 0x4, offset = 0x4, fixed_abs, tag = 'smem constant byte address 0x4 - core index']
  #allocation1 [shape = 'u32[72,128]{1,0:T(1,128)}', space=vmem, size = 0x9000, scoped, tag = 'internal scratch']
  #allocation2 [shape = 'f32[16,96]{1,0:T(8,128)}', space=vmem, size = 0x2000, scoped, tag = 'scratch operand']
  %s0 = inlined_call_operand.hbm [shape: bf16[16,32], index: 0, kind: input, shape index: {}]
  %s1 = inlined_call_operand.hbm [shape: bf16[32,96], index: 1, kind: input, shape index: {}]
  %s2 = inlined_call_operand.vmem [shape: f32[1,96], index: 2, kind: input, shape index: {}]
  %s3 = inlined_call_operand.hbm [shape: bf16[16,96], index: 3, kind: output, shape index: {}]
  %s4 = sld [smem:[#allocation0]]
  $region38: #{tpu_custom_call.1} parent=0
    _
  %s6 = ssub.s32 1, %s4
  %s7 = scalar_select 0, %s6, %s4
  $region1: #{tpu_custom_call.1} parent=0
    #allocation3 [shape = 'u8[4096]{0}', space=vmem, size = 0x1000, scoped, tag = 'input window, operand 0, single buffered']
    #allocation4 [shape = 's32[1]{0}', space=sflag, size = 0x4, scoped, tag = 'scoped memory for tpu_custom_call.1']
    #allocation5 [shape = 's32[1]{0}', space=sflag, size = 0x4, scoped, tag = 'scoped memory for tpu_custom_call.1']
    #allocation6 [shape = 'u8[8192]{0}', space=vmem, size = 0x2000, scoped, tag = 'input window, operand 1, single buffered']
    #allocation7 [shape = 's32[1]{0}', space=sflag, size = 0x4, scoped, tag = 'scoped memory for tpu_custom_call.1']
    #allocation8 [shape = 'u8[4096]{0}', space=vmem, size = 0x1000, scoped, tag = 'output window, operand 0, single buffered']
    %8 = vsyncpa [#allocation4], 0
    %9 = vsyncpa [#allocation7], 0
    %10 = vsyncpa [#allocation5], 0
    // Predicated region
    $region2: #{tpu_custom_call.1} parent=1 // pred_check
      _
    $region3: #{tpu_custom_call.1} parent=1 // pred_check_branch
      %12 = sbr.rel (0) target = $region5
    $region4: #{tpu_custom_call.1} parent=1 // pred_region
      %14 = vsyncadd [#allocation4], 0
      %s15 = sshll.u32 %s0, 4
      %s16 = int_to_ptr.hbm [resolvable:$true] %s15
      %s17 = sshll.u32 [#allocation3], 4
      %s18 = int_to_ptr.vmem [resolvable:$true] %s17
      %23 = dma.hbm_to_vmem [thread:$0]  %s16, 128, %s18, [#allocation4], 64, 64, 4
    $region5: #{tpu_custom_call.1} parent=1 // pred_fallthru
      _
    // Predicated region
    $region6: #{tpu_custom_call.1} parent=1 // pred_check
      _
    $region7: #{tpu_custom_call.1} parent=1 // pred_check_branch
      %25 = sbr.rel (0) target = $region9
    $region8: #{tpu_custom_call.1} parent=1 // pred_region
      %27 = vsyncadd [#allocation7], 0
      %s28 = sshll.u32 %s1, 4
      %s29 = int_to_ptr.hbm [resolvable:$true] %s28
      %s30 = sshll.u32 [#allocation6], 4
      %s31 = int_to_ptr.vmem [resolvable:$true] %s30
      %36 = dma.hbm_to_vmem [thread:$0]  %s29, 256, %s31, [#allocation7], 64, 64, 4
    $region9: #{tpu_custom_call.1} parent=1 // pred_fallthru
      _
    // Predicated region
    $region10: #{tpu_custom_call.1} parent=1 // pred_check
      _
    $region11: #{tpu_custom_call.1} parent=1 // pred_check_branch
      %38 = sbr.rel (0) target = $region13
    $region12: #{tpu_custom_call.1} parent=1 // pred_region
      _
    $region13: #{tpu_custom_call.1} parent=1 // pred_fallthru
      _
    // Predicated region
    $region14: #{tpu_custom_call.1} parent=1 // pred_check
      _
    $region15: #{tpu_custom_call.1} parent=1 // pred_check_branch
      %40 = sbr.rel (0) target = $region17
    $region16: #{tpu_custom_call.1} parent=1 // pred_region
      %42 = dma.done [#allocation4], 128
    $region17: #{tpu_custom_call.1} parent=1 // pred_fallthru
      _
    // Predicated region
    $region18: #{tpu_custom_call.1} parent=1 // pred_check
      _
    $region19: #{tpu_custom_call.1} parent=1 // pred_check_branch
      %44 = sbr.rel (0) target = $region21
    $region20: #{tpu_custom_call.1} parent=1 // pred_region
      %46 = dma.done [#allocation7], 256
    $region21: #{tpu_custom_call.1} parent=1 // pred_fallthru
      _
    %p48 = scmp.eq.s32.totalorder 0, 0
    // Predicated region
    $region22: #{tpu_custom_call.1} parent=1 // pred_check
      %p49 = pneg %p48
    $region23: #{tpu_custom_call.1} parent=1 // pred_check_branch
      %51 = sbr.rel (%p49) target = $region25
    $region24: #{tpu_custom_call.1} parent=1 // pred_region
      %vm52 = vcmask 785408
      %53 = vst.msk [vmem:[#allocation2] sm:$0xff] %vm52, 0.0
      %54 = vst.msk [vmem:[#allocation2 + $0x8] sm:$0xff] %vm52, 0.0
    $region25: #{tpu_custom_call.1} parent=1 // pred_fallthru
      _
    %v55 = vld [vmem:[#allocation2] sm:$0xff]
    %v56 = vld [vmem:[#allocation2 + $0x8] sm:$0xff]
    %v57 = vld [vmem:[#allocation3] sm:$0xf]
    %v58 = vld [vmem:[#allocation3 + $0x4] sm:$0xf]
    %v59 = vld [vmem:[#allocation6] sm:$0xf]
    %v60 = vld [vmem:[#allocation6 + $0x4] sm:$0xf]
    %v61 = vld [vmem:[#allocation6 + $0x8] sm:$0xf]
    %v62 = vld [vmem:[#allocation6 + $0xc] sm:$0xf]
    %v65 = vunpack.c.l.b16 %v57
    %v66 = vunpack.c.l.b16 %v58
    %v67 = vpack.c.b16 %v66, %v65
    %v72 = vunpack.c.l.b16 %v59
    %v73 = vunpack.c.l.b16 %v60
    %v74 = vunpack.c.l.b16 %v61
    %v75 = vunpack.c.l.b16 %v62
    %v76 = vpack.c.b16 %v73, %v72
    %v77 = vpack.c.b16 %v75, %v74
    %vm80 = vcmask 261120
    %v82 = vsel %vm80, %v67, 0
    %84 = vmatpush.bf16.msra.mxu0 0
    %85 = vmatpush.bf16.msra.mxu0 0
    %86 = vmatpush.bf16.msra.mxu0 0
    %87 = vmatpush.bf16.msra.mxu0 0
    %88 = vmatpush.bf16.msra.mxu0 0
    %89 = vmatpush.bf16.msra.mxu0 0
    %90 = vmatpush.bf16.msra.mxu0 %v77
    %91 = vmatpush.bf16.msra.mxu0 %v76
    %92 = vmatmul.bf16.gmra.mxu0 %v82
    %v93 = vpop.f32.mrf.mxu0
    %v94 = vadd.f32 0.0, %v93
    %v95 = vpop.f32.mrf.mxu0
    %v96 = vadd.f32 0.0, %v95
    %97 = vdwg.mxu0
    %v98 = vadd.f32 %v55, %v94
    %v99 = vadd.f32 %v56, %v96
    %vm100 = vcmask 785408
    %101 = vst.msk [vmem:[#allocation2] sm:$0xff] %vm100, %v98
    %102 = vst.msk [vmem:[#allocation2 + $0x8] sm:$0xff] %vm100, %v99
    // Predicated region
    $region26: #{tpu_custom_call.1} parent=1 // pred_check
      %p103 = pneg %p48
    $region27: #{tpu_custom_call.1} parent=1 // pred_check_branch
      %105 = sbr.rel (%p103) target = $region29
    $region28: #{tpu_custom_call.1} parent=1 // pred_region
      %v106 = vld [vmem:[#allocation2] sm:$0xff]
      %v107 = vld [vmem:[#allocation2 + $0x8] sm:$0xff]
      %v108 = vld [vmem:[%s2] sm:$0x1]
      %v110 = vperm.slane %v108, 0
      %v112 = vadd.f32 %v106, %v110
      %v113 = vadd.f32 %v107, %v110
      %v114 = vpack.c.bf16 %v112, %v112
      %v115 = vpack.c.bf16 %v113, %v113
      %vm116 = vcmask 781312
      %117 = vst.msk [vmem:[#allocation8] sm:$0xf] %vm116, %v114
      %118 = vst.msk [vmem:[#allocation8 + $0x4] sm:$0xf] %vm116, %v115
    $region29: #{tpu_custom_call.1} parent=1 // pred_fallthru
      _
    // Predicated region
    $region30: #{tpu_custom_call.1} parent=1 // pred_check
      _
    $region31: #{tpu_custom_call.1} parent=1 // pred_check_branch
      %120 = sbr.rel (0) target = $region33
    $region32: #{tpu_custom_call.1} parent=1 // pred_region
      %122 = vsyncadd [#allocation5], 0
      %s123 = sshll.u32 [#allocation8], 4
      %s124 = int_to_ptr.vmem [resolvable:$true] %s123
      %s125 = sshll.u32 %s3, 4
      %s126 = int_to_ptr.hbm [resolvable:$true] %s125
      %131 = dma.vmem_to_hbm [thread:$0]  %s124, 128, %s126, [#allocation5], 64, 64, 4
    $region33: #{tpu_custom_call.1} parent=1 // pred_fallthru
      _
    // Predicated region
    $region34: #{tpu_custom_call.1} parent=1 // pred_check
      _
    $region35: #{tpu_custom_call.1} parent=1 // pred_check_branch
      %133 = sbr.rel (0) target = $region37
    $region36: #{tpu_custom_call.1} parent=1 // pred_region
      %135 = dma.done [#allocation5], 128
    $region37: #{tpu_custom_call.1} parent=1 // pred_fallthru
      _
    %136 = vsyncpa [#allocation4], 1
    %137 = vsyncpa [#allocation7], 1
    %138 = vsyncpa [#allocation5], 1

</llo_original>
